<compile_context>
chip_gen: v7x
topology: tpu7x:2x2x1
jax: 0.10.0
libtpu: 0.0.40
codegen_flags: <defaults>
</compile_context>

<pallas_src>
import functools

import jax
import jax.numpy as jnp
from jax.experimental import pallas as pl
from jax.experimental.pallas import tpu as pltpu


def _round_up(x, k):
    return (x + k - 1) // k * k


def _bce_row_sum_kernel(o_ref, t_ref, out_ref, *, n_rows, tile_r,
                        binary_targets, sanitize_rows):
    """Per-row BCE sums for one row tile.

    o_ref, t_ref : (tile_r, M) VMEM tiles (any float dtype; cast here).
    out_ref      : (tile_r, 1) f32 — sum of BCE over the C*H*W lane axis.
    """
    o = o_ref[...].astype(jnp.float32)
    t = t_ref[...].astype(jnp.float32)

    if sanitize_rows:
        # The last row tile may extend past n_rows; that part of the VMEM
        # buffer holds stale garbage.  Sanitize BEFORE the logs so NaN/Inf
        # can never appear (those rows are never written back, but keep
        # them finite anyway).
        row = (pl.program_id(0) * tile_r
               + jax.lax.broadcasted_iota(jnp.int32, (tile_r, 1), 0))
        valid = row < n_rows
        o = jnp.where(valid, o, 0.5)
        t = jnp.where(valid, t, 0.0)

    if binary_targets:
        # Single-transcendental fast path (exact for t in {0, 1}).
        p = jnp.where(t > 0.5, o, 1.0 - o)
        bce = -jnp.maximum(jnp.log(p), -100.0)
    else:
        # torch.nn.BCELoss clamps each log term at -100 (handles o == 0 / 1).
        log_o = jnp.maximum(jnp.log(o), -100.0)
        log_1mo = jnp.maximum(jnp.log1p(-o), -100.0)
        bce = -(t * (log_o - log_1mo) + log_1mo)

    out_ref[...] = jnp.sum(bce, axis=-1, keepdims=True)


def _tile_plan(n, m, itemsize_sum):
    """Generation-aware (row-tile size, vmem_limit_bytes)."""
    try:
        info = pltpu.get_tpu_info()
        vmem_cap = getattr(info, "vmem_capacity_bytes", 128 * 1024 * 1024)
    except Exception:                      # not a TPU / older jax: assume 128 MiB class
        vmem_cap = 128 * 1024 * 1024
    small_vmem = vmem_cap <= 64 * 1024 * 1024          # v7x-class chip

    # One buffer-set bytes per row: both inputs (lane-padded in VMEM) plus the
    # lane-padded (tile_r, 1) f32 output column.  Double-buffering doubles it.
    m_lanes = _round_up(m, 128)
    per_row = m_lanes * itemsize_sum + 128 * 4
    block_budget = (7 if small_vmem else 14) * 1024 * 1024   # one buffer set
    vmem_limit = (48 if small_vmem else 64) * 1024 * 1024

    if n < 8:
        return n, vmem_limit                            # full-extent row block

    tile_r = max(8, (block_budget // per_row) // 8 * 8)
    tile_r = min(tile_r, n // 8 * 8)                    # only the last tile is partial
    if small_vmem and pl.cdiv(n, tile_r) < 2 and n >= 16:
        # v7x: make at least two row tiles so both TensorCores get work.
        tile_r = min(max(8, _round_up(pl.cdiv(n, 2), 8)), n // 8 * 8)
    return tile_r, vmem_limit


def bce_row_sums(output2d, target2d, *, binary_targets=False):
    """(N, 1) f32 per-row sums of element-wise BCE(output, target).

    output2d / target2d: (N, M) arrays (N = B*T, M = C*H*W) in native dtype —
    bf16 inputs stay bf16 in HBM; the f32 cast happens inside the kernel.
    """
    assert output2d.shape == target2d.shape
    n, m = output2d.shape
    itemsize_sum = output2d.dtype.itemsize + target2d.dtype.itemsize
    tile_r, vmem_limit = _tile_plan(n, m, itemsize_sum)
    num_tiles = pl.cdiv(n, tile_r)
    sanitize_rows = (n % tile_r) != 0

    kernel = functools.partial(
        _bce_row_sum_kernel, n_rows=n, tile_r=tile_r,
        binary_targets=binary_targets, sanitize_rows=sanitize_rows)

    cost = pl.CostEstimate(
        flops=(5 if binary_targets else 8) * n * m,
        transcendentals=(1 if binary_targets else 2) * n * m,
        bytes_accessed=int(output2d.size * output2d.dtype.itemsize
                           + target2d.size * target2d.dtype.itemsize
                           + n * 4),
    )

    return pl.pallas_call(
        kernel,
        out_shape=jax.ShapeDtypeStruct((n, 1), jnp.float32),
        grid=(num_tiles,),
        in_specs=[
            # Full-extent lane axis: works for any C*H*W, no host-side pad pass.
            pl.BlockSpec((tile_r, m), lambda i: (i, 0)),
            pl.BlockSpec((tile_r, m), lambda i: (i, 0)),
        ],
        out_specs=pl.BlockSpec((tile_r, 1), lambda i: (i, 0)),
        compiler_params=pltpu.CompilerParams(
            dimension_semantics=("parallel",),
            vmem_limit_bytes=vmem_limit),
        cost_estimate=cost,
    )(output2d, target2d)


def scale_wise_loss(outputs, targets, padding_masks, scale_loss_weights, scales,
                    loss_calculation_scales=None, scale_loss_flag=True,
                    binary_targets=False, min_pallas_elements=0):
    """JAX/Pallas port of ScaleWiseLoss.forward.

    outputs / targets: lists (one per scale) of (B, T, C, H, W) arrays in (0, 1).
    padding_masks    : (B, T+1) array; [:, 1:] is used, matching the module.
    Returns (total_loss, {scale: weighted_scale_loss}).
    """
    loss_calculation_scales = (loss_calculation_scales
                               if loss_calculation_scales else scales)

    padding_mask = padding_masks[:, 1:].astype(jnp.float32)      # (B, T)
    mask_col = padding_mask.reshape(-1, 1)                       # (B*T, 1)
    mask_sum = jnp.sum(mask_col)
    # NOTE: the PyTorch module divides by mask.sum() unconditionally (NaN for an
    # all-padded batch); guard that degenerate case here as the review suggested.
    inv_mask_sum = jnp.where(mask_sum > 0, 1.0 / mask_sum, 0.0)

    total_loss = jnp.float32(0.0)
    scale_loss_dict = {}
    # TODO(synk): scales sharing the same C*H*W could be concatenated along the
    # row axis into a single pallas_call to amortize launch/pipeline warm-up.
    for scale_idx, scale in enumerate(scales):
        if scale not in loss_calculation_scales:
            continue
        output = outputs[scale_idx]
        target = targets[scale_idx]
        assert output.shape == target.shape, (
            f'Shape of outputs and targets should be the same across scales '
            f'{output.shape} != {target.shape}')
        b, t, c, h, w = output.shape
        assert (b, t) == padding_mask.shape, (
            f'Shape of outputs and padding masks should be the same across '
            f'scales {(b, t)} != {padding_mask.shape}')

        # Keep native dtype (cast happens in-kernel); reshape is a free view.
        o2 = output.reshape(b * t, c * h * w)
        t2 = target.reshape(b * t, c * h * w)

        if o2.size < min_pallas_elements:
            # Tiny scale: a single-tile pallas_call is dominated by launch /
            # warm-up cost — compute it with plain XLA instead.
            of = o2.astype(jnp.float32)
            tf = t2.astype(jnp.float32)
            log_o = jnp.maximum(jnp.log(of), -100.0)
            log_1mo = jnp.maximum(jnp.log1p(-of), -100.0)
            row_sums = jnp.sum(-(tf * (log_o - log_1mo) + log_1mo),
                               axis=-1, keepdims=True)
        else:
            row_sums = bce_row_sums(o2, t2, binary_targets=binary_targets)

        # Tiny XLA epilogue: fold padding mask, 1/(H*W) and 1/mask.sum().
        scale_loss = jnp.sum(row_sums * mask_col) * (inv_mask_sum / (h * w))
        weighted = (scale_loss_weights[scale_idx] * scale_loss
                    if scale_loss_flag else scale_loss)
        scale_loss_dict[scale] = weighted
        total_loss = total_loss + weighted
    return total_loss, scale_loss_dict


def _reference_scale_wise_loss(outputs, targets, padding_masks, weights, scales):
    """Pure-jnp reference (direct port of the PyTorch forward) for verification."""
    padding_mask = padding_masks[:, 1:].astype(jnp.float32)
    total = jnp.float32(0.0)
    for idx, _scale in enumerate(scales):
        o = outputs[idx].astype(jnp.float32)
        t = targets[idx].astype(jnp.float32)
        log_o = jnp.maximum(jnp.log(o), -100.0)
        log_1mo = jnp.maximum(jnp.log1p(-o), -100.0)
        bce = -(t * log_o + (1.0 - t) * log_1mo)
        m = padding_mask[:, :, None, None, None]
        s = jnp.sum(bce * m) / (o.shape[3] * o.shape[4]) / jnp.sum(m)
        total = total + weights[idx] * s
    return total


if __name__ == "__main__":
    key = jax.random.PRNGKey(0)
    k1, _ = jax.random.split(key)

    # Small shapes consistent with the module: B=2, T=5, C=1; scales [1, 2]
    # with spatial 16 and 8 -> lane widths 256 (128-multiple) and 64 (ragged),
    # and B*T = 10 rows (not a multiple of 8) to exercise the in-kernel
    # ragged-row sanitization and a 2-tile grid.
    B, T, C = 2, 5, 1
    scales = [1, 2]
    spatial = {1: 16, 2: 8}

    outputs, targets = [], []
    for i, scale in enumerate(scales):
        hw = spatial[scale]
        ko, kt = jax.random.split(jax.random.fold_in(k1, i))
        # outputs must be in (0, 1) for BCELoss -> sigmoid of gaussian noise.
        out = jax.nn.sigmoid(jax.random.normal(ko, (B, T, C, hw, hw), jnp.float32))
        tgt = (jax.random.uniform(kt, (B, T, C, hw, hw)) > 0.5).astype(jnp.float32)
        outputs.append(out)
        targets.append(tgt)

    # padding_masks: (B, T+1) of {0, 1}; last timestep of batch 1 is padding.
    padding_masks = jnp.ones((B, T + 1), jnp.float32)
    padding_masks = padding_masks.at[1, -1].set(0.0)

    # Deterministic "custom" scale weights (nn.Parameter in the module).
    scale_loss_weights = jnp.array([1.0, 0.5], jnp.float32)

    total_loss, scale_loss_dict = scale_wise_loss(
        outputs, targets, padding_masks, scale_loss_weights, scales)
    total_loss = jax.block_until_ready(total_loss)

    ref = _reference_scale_wise_loss(
        outputs, targets, padding_masks, scale_loss_weights, scales)
    assert jnp.allclose(total_loss, ref, rtol=1e-4, atol=1e-5), (total_loss, ref)
    assert jnp.allclose(
        sum(scale_loss_dict.values()), total_loss, rtol=1e-5, atol=1e-6)

    # Binary-target single-log fast path (targets here are exactly {0, 1}).
    total_bin, _ = scale_wise_loss(
        outputs, targets, padding_masks, scale_loss_weights, scales,
        binary_targets=True)
    total_bin = jax.block_until_ready(total_bin)
    assert jnp.allclose(total_bin, ref, rtol=1e-3, atol=1e-4), (total_bin, ref)

    print("KERNEL_OK")
</pallas_src>

<mosaic_0001>
module attributes {stable_mosaic.version = 11 : i64} {
  func.func @_bce_row_sum_kernel(%arg0: i32, %arg1: memref<8x256xf32, #tpu.memory_space<vmem>>, %arg2: memref<8x256xf32, #tpu.memory_space<vmem>>, %arg3: memref<8x1xf32, #tpu.memory_space<vmem>>) attributes {dimension_semantics = [#tpu.dimension_semantics<parallel>], iteration_bounds = array<i64: 2>, scalar_prefetch = 0 : i64, scratch_operands = 0 : i64, tpu.core_type = #tpu.core_type<tc>, window_params = [{transform_indices = @transform_0, window_bounds = array<i64: 8, 256>}, {transform_indices = @transform_1, window_bounds = array<i64: 8, 256>}, {transform_indices = @transform_2, window_bounds = array<i64: 8, 1>}]} {
    %c0 = arith.constant 0 : index
    %c0_0 = arith.constant 0 : index
    %0 = vector.load %arg1[%c0, %c0_0] : memref<8x256xf32, #tpu.memory_space<vmem>>, vector<8x256xf32>
    %c0_1 = arith.constant 0 : index
    %c0_2 = arith.constant 0 : index
    %1 = vector.load %arg2[%c0_1, %c0_2] : memref<8x256xf32, #tpu.memory_space<vmem>>, vector<8x256xf32>
    %c8_i32 = arith.constant 8 : i32
    %2 = arith.muli %arg0, %c8_i32 : i32
    %3 = tpu.iota {dimensions = array<i32: 0>} : vector<8x1xi32>
    %4 = vector.broadcast %2 : i32 to vector<8x1xi32>
    %5 = arith.addi %4, %3 : vector<8x1xi32>
    %c10_i32 = arith.constant 10 : i32
    %6 = vector.broadcast %c10_i32 : i32 to vector<8x1xi32>
    %7 = arith.cmpi slt, %5, %6 : vector<8x1xi32>
    %cst = arith.constant 5.000000e-01 : f32
    %8 = vector.shape_cast %7 : vector<8x1xi1> to vector<8x1xi1>
    %9 = vector.broadcast %8 : vector<8x1xi1> to vector<8x256xi1>
    %10 = vector.broadcast %cst : f32 to vector<8x256xf32>
    %11 = arith.select %9, %0, %10 : vector<8x256xi1>, vector<8x256xf32>
    %cst_3 = arith.constant 0.000000e+00 : f32
    %12 = vector.shape_cast %7 : vector<8x1xi1> to vector<8x1xi1>
    %13 = vector.broadcast %12 : vector<8x1xi1> to vector<8x256xi1>
    %14 = vector.broadcast %cst_3 : f32 to vector<8x256xf32>
    %15 = arith.select %13, %1, %14 : vector<8x256xi1>, vector<8x256xf32>
    %16 = math.log %11 : vector<8x256xf32>
    %cst_4 = arith.constant -1.000000e+02 : f32
    %17 = vector.broadcast %cst_4 : f32 to vector<8x256xf32>
    %18 = arith.maximumf %16, %17 : vector<8x256xf32>
    %cst_5 = arith.constant 0.000000e+00 : f32
    %19 = vector.broadcast %cst_5 : f32 to vector<8x256xf32>
    %20 = arith.subf %19, %11 : vector<8x256xf32>
    %21 = math.log1p %20 : vector<8x256xf32>
    %cst_6 = arith.constant -1.000000e+02 : f32
    %22 = vector.broadcast %cst_6 : f32 to vector<8x256xf32>
    %23 = arith.maximumf %21, %22 : vector<8x256xf32>
    %24 = arith.subf %18, %23 : vector<8x256xf32>
    %25 = arith.mulf %15, %24 : vector<8x256xf32>
    %26 = arith.addf %25, %23 : vector<8x256xf32>
    %cst_7 = arith.constant 0.000000e+00 : f32
    %27 = vector.broadcast %cst_7 : f32 to vector<8x256xf32>
    %28 = arith.subf %27, %26 : vector<8x256xf32>
    %cst_8 = arith.constant dense<0.000000e+00> : vector<8xf32>
    %29 = vector.multi_reduction <add>, %28, %cst_8 [1] : vector<8x256xf32> to vector<8xf32>
    %30 = vector.shape_cast %29 : vector<8xf32> to vector<8x1xf32>
    %c0_9 = arith.constant 0 : index
    %c0_10 = arith.constant 0 : index
    %31 = vector.load %arg3[%c0_9, %c0_10] : memref<8x1xf32, #tpu.memory_space<vmem>>, vector<8x1xf32>
    tpu.vector_store %arg3[%c0_9, %c0_10], %30 {strides = array<i32>} : memref<8x1xf32, #tpu.memory_space<vmem>>, vector<8x1xf32>,
    return
  }
  func.func @transform_0(%arg0: i32) -> (i32, i32) {
    %c0_i32 = arith.constant 0 : i32
    %c0_i32_0 = arith.constant 0 : i32
    return %arg0, %c0_i32 : i32, i32
  }
  func.func @transform_1(%arg0: i32) -> (i32, i32) {
    %c0_i32 = arith.constant 0 : i32
    %c0_i32_0 = arith.constant 0 : i32
    return %arg0, %c0_i32 : i32, i32
  }
  func.func @transform_2(%arg0: i32) -> (i32, i32) {
    %c0_i32 = arith.constant 0 : i32
    %c0_i32_0 = arith.constant 0 : i32
    return %arg0, %c0_i32 : i32, i32
  }
}

</mosaic_0001>

<llo_original>
// kernel: tpu_custom_call.1
$region0: #{tpu_custom_call.1}
  #allocation0 [shape = 'u32[]', space=smem, size = 0x4, offset = 0x4, fixed_abs, tag = 'smem constant byte address 0x4 - core index']
  #allocation1 [shape = 'u32[144,128]{1,0:T(1,128)}', space=vmem, size = 0x12000, scoped, tag = 'internal scratch']
  %s0 = inlined_call_operand.hbm [shape: f32[10,256], index: 0, kind: input, shape index: {}]
  %s1 = inlined_call_operand.hbm [shape: f32[10,256], index: 1, kind: input, shape index: {}]
  %s2 = inlined_call_operand.hbm [shape: f32[10,1], index: 2, kind: output, shape index: {}]
  %s3 = sld [smem:[#allocation0]]
  $region49: #{tpu_custom_call.1} parent=0
    _
  %s5 = ssub.s32 1, %s3
  %s6 = scalar_select 0, %s5, %s3
  $region1: #{tpu_custom_call.1} parent=0
    #allocation2 [shape = 'u8[16384]{0}', space=vmem, size = 0x4000, scoped, tag = 'input window, operand 0']
    #allocation3 [shape = 's32[2]{0}', space=sflag, size = 0x8, scoped, tag = 'scoped memory for tpu_custom_call.1']
    #allocation4 [shape = 's32[2]{0}', space=sflag, size = 0x8, scoped, tag = 'scoped memory for tpu_custom_call.1']
    #allocation5 [shape = 'u8[16384]{0}', space=vmem, size = 0x4000, scoped, tag = 'input window, operand 1']
    #allocation6 [shape = 's32[2]{0}', space=sflag, size = 0x8, scoped, tag = 'scoped memory for tpu_custom_call.1']
    #allocation7 [shape = 'u8[8192]{0}', space=vmem, size = 0x2000, scoped, tag = 'output window, operand 0']
    %7 = vsyncpa [#allocation3], 0
    %s8 = scalar_lea.sflag [#allocation3], 1
    %9 = vsyncpa %s8, 0
    %10 = vsyncpa [#allocation6], 0
    %s11 = scalar_lea.sflag [#allocation6], 1
    %12 = vsyncpa %s11, 0
    %13 = vsyncpa [#allocation4], 0
    %s14 = scalar_lea.sflag [#allocation4], 1
    %15 = vsyncpa %s14, 0
    loop: start=0, step=1, limit=4
    $region2: #{tpu_custom_call.1} parent=1 // loop_pre_header
      _
    $region3: #{tpu_custom_call.1} parent=1 // loop_header
      %s17 = sphi 0, %s21
      %p18 = scmp.ge.s32.totalorder %s17, 4
      %s27 = sphi 0, %s29
      %s30 = sphi 0, %s27
      %s31 = sphi 0, %s30
      %s47 = sphi 0, %s31
      %s53 = sphi 0, %s55
      %s56 = sphi 0, %s53
      %s57 = sphi 0, %s56
      %s73 = sphi 0, %s57
      %s79 = sphi 0, %s81
      %s82 = sphi 0, %s79
      %s83 = sphi 0, %s82
      %s99 = sphi 0, %s83
    $region4: #{tpu_custom_call.1} parent=1 // loop_header_branch
      %20 = sbr.rel (%p18) target = $region8
    $region5: #{tpu_custom_call.1} parent=1 // loop_body
      %s22 = ssub.s32 %s17, 1
      %s23 = ssub.s32 %s17, 2
      %s24 = sadd.s32 %s17, 1
      %s25 = ssub.s32 %s17, %s24
      %p26 = scmp.eq.s32.totalorder %s25, 0
      %s28 = sadd.s32 %s27, 1
      %s29 = scalar_select %p26, %s27, %s28
      %p32 = pneg %p26
      %p33 = scmp.eq.s32.totalorder %s17, 1
      %p34 = por %p32, %p33
      %p35 = scmp.ne.s32.totalorder %s27, %s30
      %p36 = scmp.eq.s32.totalorder %s17, 0
      %p37 = por %p35, %p36
      %p38 = scmp.ne.s32.totalorder %s27, %s30
      %p39 = scmp.eq.s32.totalorder %s22, 1
      %p40 = por %p38, %p39
      %p41 = scmp.ne.s32.totalorder %s30, %s31
      %p42 = scmp.eq.s32.totalorder %s22, 0
      %p43 = por %p41, %p42
      %p44 = scmp.ne.s32.totalorder %s30, %s31
      %p45 = scmp.eq.s32.totalorder %s23, 1
      %p46 = por %p44, %p45
      %p48 = scmp.ne.s32.totalorder %s31, %s47
      %p49 = scmp.eq.s32.totalorder %s23, 0
      %p50 = por %p48, %p49
      %s51 = ssub.s32 %s17, %s24
      %p52 = scmp.eq.s32.totalorder %s51, 0
      %s54 = sadd.s32 %s53, 1
      %s55 = scalar_select %p52, %s53, %s54
      %p58 = pneg %p52
      %p59 = scmp.eq.s32.totalorder %s17, 1
      %p60 = por %p58, %p59
      %p61 = scmp.ne.s32.totalorder %s53, %s56
      %p62 = scmp.eq.s32.totalorder %s17, 0
      %p63 = por %p61, %p62
      %p64 = scmp.ne.s32.totalorder %s53, %s56
      %p65 = scmp.eq.s32.totalorder %s22, 1
      %p66 = por %p64, %p65
      %p67 = scmp.ne.s32.totalorder %s56, %s57
      %p68 = scmp.eq.s32.totalorder %s22, 0
      %p69 = por %p67, %p68
      %p70 = scmp.ne.s32.totalorder %s56, %s57
      %p71 = scmp.eq.s32.totalorder %s23, 1
      %p72 = por %p70, %p71
      %p74 = scmp.ne.s32.totalorder %s57, %s73
      %p75 = scmp.eq.s32.totalorder %s23, 0
      %p76 = por %p74, %p75
      %s77 = ssub.s32 %s17, %s24
      %p78 = scmp.eq.s32.totalorder %s77, 0
      %s80 = sadd.s32 %s79, 1
      %s81 = scalar_select %p78, %s79, %s80
      %p84 = pneg %p78
      %p85 = scmp.eq.s32.totalorder %s17, 1
      %p86 = por %p84, %p85
      %p87 = scmp.ne.s32.totalorder %s79, %s82
      %p88 = scmp.eq.s32.totalorder %s17, 0
      %p89 = por %p87, %p88
      %p90 = scmp.ne.s32.totalorder %s79, %s82
      %p91 = scmp.eq.s32.totalorder %s22, 1
      %p92 = por %p90, %p91
      %p93 = scmp.ne.s32.totalorder %s82, %s83
      %p94 = scmp.eq.s32.totalorder %s22, 0
      %p95 = por %p93, %p94
      %p96 = scmp.ne.s32.totalorder %s82, %s83
      %p97 = scmp.eq.s32.totalorder %s23, 1
      %p98 = por %p96, %p97
      %p100 = scmp.ne.s32.totalorder %s83, %s99
      %p101 = scmp.eq.s32.totalorder %s23, 0
      %p102 = por %p100, %p101
      %p103 = scmp.le.s32.totalorder 1, %s17
      %p104 = scmp.lt.s32.totalorder %s17, 3
      %p105 = pnand %p103, %p104
      %p106 = pneg %p105
      // Predicated region
      $region9: #{tpu_custom_call.1} parent=5 // pred_check
        _
      $region10: #{tpu_custom_call.1} parent=5 // pred_check_branch
        %108 = sbr.rel (%p105) target = $region12
      $region11: #{tpu_custom_call.1} parent=5 // pred_region
        %s109 = ssub.s32 %s17, 1
      $region12: #{tpu_custom_call.1} parent=5 // pred_fallthru
        _
      %p110 = scmp.lt.s32.totalorder %s17, 2
      // Predicated region
      $region13: #{tpu_custom_call.1} parent=5 // pred_check
        %p111 = pneg %p110
      $region14: #{tpu_custom_call.1} parent=5 // pred_check_branch
        %113 = sbr.rel (%p111) target = $region16
      $region15: #{tpu_custom_call.1} parent=5 // pred_region
        // Predicated region
        $region17: #{tpu_custom_call.1} parent=15 // pred_check
          %p114 = pneg %p37
        $region18: #{tpu_custom_call.1} parent=15 // pred_check_branch
          %116 = sbr.rel (%p114) target = $region20
        $region19: #{tpu_custom_call.1} parent=15 // pred_region
          %s117 = sand.u32 %s27, 1
          %s118 = scalar_lea.sflag [#allocation3], %s117
          %s119 = sand.u32 %s27, 1
          %s120 = smul.addr %s119, 16
          %s121 = scalar_lea.vmem [#allocation2], %s120
          %s123 = ssub.s32 256, 256
          %124 = vsyncadd %s118, %s123
          %s125 = smul.addr %s17, 2
          %s126 = smul.addr %s125, 128
          %s127 = scalar_lea.hbm %s0, %s126
          %s129 = sshll.u32 %s121, 4
          %s130 = int_to_ptr.vmem [resolvable:$true] %s129
          %132 = dma.hbm_to_vmem [thread:$0]  %s127, 256, %s130, %s118
        $region20: #{tpu_custom_call.1} parent=15 // pred_fallthru
          _
        // Predicated region
        $region21: #{tpu_custom_call.1} parent=15 // pred_check
          %p133 = pneg %p63
        $region22: #{tpu_custom_call.1} parent=15 // pred_check_branch
          %135 = sbr.rel (%p133) target = $region24
        $region23: #{tpu_custom_call.1} parent=15 // pred_region
          %s136 = sand.u32 %s53, 1
          %s137 = scalar_lea.sflag [#allocation6], %s136
          %s138 = sand.u32 %s53, 1
          %s139 = smul.addr %s138, 16
          %s140 = scalar_lea.vmem [#allocation5], %s139
          %s142 = ssub.s32 256, 256
          %143 = vsyncadd %s137, %s142
          %s144 = smul.addr %s17, 2
          %s145 = smul.addr %s144, 128
          %s146 = scalar_lea.hbm %s1, %s145
          %s148 = sshll.u32 %s140, 4
          %s149 = int_to_ptr.vmem [resolvable:$true] %s148
          %151 = dma.hbm_to_vmem [thread:$0]  %s146, 256, %s149, %s137
        $region24: #{tpu_custom_call.1} parent=15 // pred_fallthru
          _
      $region16: #{tpu_custom_call.1} parent=5 // pred_fallthru
        _
      %p152 = scmp.le.s32.totalorder 1, %s17
      %p153 = scmp.lt.s32.totalorder %s17, 3
      %p154 = pnand %p152, %p153
      %p155 = pneg %p154
      // Predicated region
      $region25: #{tpu_custom_call.1} parent=5 // pred_check
        _
      $region26: #{tpu_custom_call.1} parent=5 // pred_check_branch
        %157 = sbr.rel (%p154) target = $region28
      $region27: #{tpu_custom_call.1} parent=5 // pred_region
        %s158 = ssub.s32 %s17, 1
        %s159 = sand.u32 %s30, 1
        %s160 = scalar_lea.sflag [#allocation3], %s159
        %s161 = sand.u32 %s30, 1
        %s162 = smul.addr %s161, 16
        %s163 = scalar_lea.vmem [#allocation2], %s162
        // Predicated region
        $region29: #{tpu_custom_call.1} parent=27 // pred_check
          %p164 = pneg %p43
        $region30: #{tpu_custom_call.1} parent=27 // pred_check_branch
          %166 = sbr.rel (%p164) target = $region32
        $region31: #{tpu_custom_call.1} parent=27 // pred_region
          %167 = dma.done %s160, 256
        $region32: #{tpu_custom_call.1} parent=27 // pred_fallthru
          _
        %s168 = sand.u32 %s56, 1
        %s169 = scalar_lea.sflag [#allocation6], %s168
        %s170 = sand.u32 %s56, 1
        %s171 = smul.addr %s170, 16
        %s172 = scalar_lea.vmem [#allocation5], %s171
        // Predicated region
        $region33: #{tpu_custom_call.1} parent=27 // pred_check
          %p173 = pneg %p69
        $region34: #{tpu_custom_call.1} parent=27 // pred_check_branch
          %175 = sbr.rel (%p173) target = $region36
        $region35: #{tpu_custom_call.1} parent=27 // pred_region
          %176 = dma.done %s169, 256
        $region36: #{tpu_custom_call.1} parent=27 // pred_fallthru
          _
        %s177 = sand.u32 %s30, 1
        %s178 = scalar_lea.sflag [#allocation3], %s177
        %s179 = sand.u32 %s30, 1
        %s180 = smul.addr %s179, 16
        %s181 = scalar_lea.vmem [#allocation2], %s180
        %p182 = pneg %p43
        %p183 = pneg %p40
        %s184 = sand.u32 %s56, 1
        %s185 = scalar_lea.sflag [#allocation6], %s184
        %s186 = sand.u32 %s56, 1
        %s187 = smul.addr %s186, 16
        %s188 = scalar_lea.vmem [#allocation5], %s187
        %p189 = pneg %p69
        %p190 = pneg %p66
        %p191 = pneg %p95
        %p192 = pneg %p92
        %s193 = sand.u32 %s82, 1
        %s194 = scalar_lea.sflag [#allocation4], %s193
        %s195 = sand.u32 %s82, 1
        %s196 = smul.addr %s195, 8
        %s197 = scalar_lea.vmem [#allocation7], %s196
        %v198 = vld [vmem:[%s163] sm:$0xff]
        %v199 = vld [vmem:[%s163 + $0x8] sm:$0xff]
        %v200 = vld [vmem:[%s172] sm:$0xff]
        %v201 = vld [vmem:[%s172 + $0x8] sm:$0xff]
        %s202 = smul.u32 %s22, 8
        %v203 = vlaneseq
        %v204 = vshrl.u32 %v203, 7
        %v205 = vstv %s202
        %v206 = vadd.s32 %v205, %v204
        %vm207 = vcmp.lt.s32.totalorder %v206, 10
        %v208 = vsel %vm207, 1, 0
        %vm209 = vcmp.eq.s32.totalorder %v208, 1
        %v210 = vsel %vm209, %v198, 0.5
        %v211 = vsel %vm209, %v199, 0.5
        %v212 = vsel %vm209, %v200, 0.0
        %v213 = vsel %vm209, %v201, 0.0
        %v214 = vlog2.pop %v210
        %v215 = vmul.f32 %v214, 0.6931472
        %v216 = vlog2.pop %v211
        %v217 = vmul.f32 %v216, 0.6931472
        %v218 = vmax.f32 %v215, -100.0
        %v219 = vmax.f32 %v217, -100.0
        %v220 = vsub.f32 0.0, %v210
        %v221 = vsub.f32 0.0, %v211
        %v222 = vadd.f32 %v220, 1.0
        %v223 = vlog2.pop %v222
        %v224 = vmul.f32 %v223, 0.6931472
        %v225 = vmul.f32 -0.5, %v220
        %v226 = vadd.f32 %v225, 1.0
        %v227 = vmul.f32 %v226, %v220
        %v228 = vand.u32 2147483647, %v220
        %vm229 = vcmp.lt.f32.partialorder %v228, 0.0004427343
        %v230 = vsel %vm229, %v227, %v224
        %v231 = vadd.f32 %v221, 1.0
        %v232 = vlog2.pop %v231
        %v233 = vmul.f32 %v232, 0.6931472
        %v234 = vmul.f32 -0.5, %v221
        %v235 = vadd.f32 %v234, 1.0
        %v236 = vmul.f32 %v235, %v221
        %v237 = vand.u32 2147483647, %v221
        %vm238 = vcmp.lt.f32.partialorder %v237, 0.0004427343
        %v239 = vsel %vm238, %v236, %v233
        %v240 = vmax.f32 %v230, -100.0
        %v241 = vmax.f32 %v239, -100.0
        %v242 = vsub.f32 %v218, %v240
        %v243 = vsub.f32 %v219, %v241
        %v244 = vmul.f32 %v212, %v242
        %v245 = vmul.f32 %v213, %v243
        %v246 = vadd.f32 %v244, %v240
        %v247 = vadd.f32 %v245, %v241
        %v248 = vsub.f32 0.0, %v246
        %v249 = vsub.f32 0.0, %v247
        %v250 = vadd.f32 %v248, %v249
        %251 = vadd.xlane.f32.xlu0 %v250
        %v252 = vpop.xlane.xlu0 %251
        %vm253 = vcmask 7168
        %254 = vst.msk [vmem:[%s197] sm:$0xff] %vm253, %v252
        %s255 = sand.u32 %s82, 1
        %s256 = scalar_lea.sflag [#allocation4], %s255
        %s257 = sand.u32 %s82, 1
        %s258 = smul.addr %s257, 8
        %s259 = scalar_lea.vmem [#allocation7], %s258
        // Predicated region
        $region37: #{tpu_custom_call.1} parent=27 // pred_check
          %p260 = pneg %p92
        $region38: #{tpu_custom_call.1} parent=27 // pred_check_branch
          %262 = sbr.rel (%p260) target = $region40
        $region39: #{tpu_custom_call.1} parent=27 // pred_region
          %s264 = ssub.s32 128, 128
          %265 = vsyncadd %s256, %s264
          %s266 = smul.addr %s22, 128
          %s267 = scalar_lea.hbm %s2, %s266
          %s269 = sshll.u32 %s259, 4
          %s270 = int_to_ptr.vmem [resolvable:$true] %s269
          %272 = dma.vmem_to_hbm [thread:$0]  %s270, 128, %s267, %s256
        $region40: #{tpu_custom_call.1} parent=27 // pred_fallthru
          _
      $region28: #{tpu_custom_call.1} parent=5 // pred_fallthru
        _
      %p273 = scmp.le.s32.totalorder 2, %s17
      // Predicated region
      $region41: #{tpu_custom_call.1} parent=5 // pred_check
        %p274 = pneg %p273
      $region42: #{tpu_custom_call.1} parent=5 // pred_check_branch
        %276 = sbr.rel (%p274) target = $region44
      $region43: #{tpu_custom_call.1} parent=5 // pred_region
        %s277 = ssub.s32 %s17, 2
        // Predicated region
        $region45: #{tpu_custom_call.1} parent=43 // pred_check
          %p278 = pneg %p98
        $region46: #{tpu_custom_call.1} parent=43 // pred_check_branch
          %280 = sbr.rel (%p278) target = $region48
        $region47: #{tpu_custom_call.1} parent=43 // pred_region
          %s281 = sand.u32 %s83, 1
          %s282 = scalar_lea.sflag [#allocation4], %s281
          %s283 = sand.u32 %s83, 1
          %s284 = smul.addr %s283, 8
          %s285 = scalar_lea.vmem [#allocation7], %s284
          %286 = dma.done %s282, 128
        $region48: #{tpu_custom_call.1} parent=43 // pred_fallthru
          _
      $region44: #{tpu_custom_call.1} parent=5 // pred_fallthru
        _
    $region6: #{tpu_custom_call.1} parent=1 // loop_footer
      %s21 = sadd.s32 1, %s17
    $region7: #{tpu_custom_call.1} parent=1 // loop_footer_branch
      %16 = sbr.rel target = $region3
    $region8: #{tpu_custom_call.1} parent=1 // loop_exit
      _
    %287 = vsyncpa [#allocation3], 1
    %s288 = scalar_lea.sflag [#allocation3], 1
    %289 = vsyncpa %s288, 1
    %290 = vsyncpa [#allocation6], 1
    %s291 = scalar_lea.sflag [#allocation6], 1
    %292 = vsyncpa %s291, 1
    %293 = vsyncpa [#allocation4], 1
    %s294 = scalar_lea.sflag [#allocation4], 1
    %295 = vsyncpa %s294, 1

</llo_original>
